<compile_context>
chip_gen: v7x
topology: tpu7x:2x2x1
jax: 0.10.0
libtpu: 0.0.40
codegen_flags: <defaults>
</compile_context>

<pallas_src>
import functools

import jax
import jax.numpy as jnp
from jax.experimental import pallas as pl
from jax.experimental.pallas import tpu as pltpu


def _per_token_kernel(x_ref, out_ref, scale_ref, *, d, dequant_scale):
    # Static lane-aligned slices of the single (tm, 2d) tile (free views: d % 128 == 0).
    g = x_ref[:, :d].astype(jnp.float32) * dequant_scale
    u = x_ref[:, d:].astype(jnp.float32)
    # Dequantize the gate half only; the `up` dequant factor is folded into the
    # emitted per-token scale (saves a full-width VALU multiply per block).
    t = g * jax.nn.sigmoid(g) * u                        # silu(gate_deq) * up_raw
    amax = jnp.max(jnp.abs(t), axis=-1, keepdims=True)   # XLU cross-lane reduce
    # Emitted scale = dequant_scale * amax / 127 (carries the folded `up` dequant).
    scale_ref[...] = amax * (dequant_scale / 127.0)
    # EUP approx reciprocal + one Newton step -> matches exact division to f32
    # precision, keeping quantized codes consistent with the emitted scale.
    amax_safe = jnp.maximum(amax, 1e-30)                 # amax==0 rows give q==0
    inv = pl.reciprocal(amax_safe, approx=True)
    inv = inv * (2.0 - amax_safe * inv)                  # Newton refinement (free: VPU slack)
    q = jnp.clip(jnp.rint(t * (127.0 * inv)), -127.0, 127.0)
    out_ref[...] = q.astype(jnp.int8)


def _static_kernel(x_ref, out_ref, *, d, dequant_scale, quant_scale):
    g = x_ref[:, :d].astype(jnp.float32) * dequant_scale
    u = x_ref[:, d:].astype(jnp.float32)
    t = g * jax.nn.sigmoid(g) * u
    # Fold the `up` dequant and the static quant scale into one constant multiplier.
    q = jnp.clip(jnp.rint(t * (dequant_scale / quant_scale)), -127.0, 127.0)
    out_ref[...] = q.astype(jnp.int8)


def _round_up(x: int, m: int) -> int:
    return ((x + m - 1) // m) * m


def _vmem_budget():
    """Generation-aware (input-tile target bytes, scoped VMEM clamp)."""
    try:
        cap = int(pltpu.get_tpu_info().vmem_capacity_bytes)
    except Exception:
        cap = 64 << 20  # conservative fallback: assume v7x (64 MiB physical VMEM)
    if cap >= (100 << 20):          # v5e / v6e: 128 MiB physical VMEM
        return 14 << 20, 96 << 20
    return 8 << 20, 48 << 20        # v7x: 64 MiB physical VMEM


def _choose_tm(num_tokens: int, d: int, target_block_bytes: int) -> int:
    """Token tile height: multiple of 32 (int8 sublane packing), input tile near
    `target_block_bytes`, and >= 2 grid steps so v7x megacore shards the token axis
    and BlockSpec pipelining has something to overlap. No divisibility requirement:
    the grid uses cdiv and Pallas pads/masks the trailing block."""
    if num_tokens <= 32:
        return num_tokens  # single block; block_shape first dim == full dim (legal)
    row_bytes = 2 * d * 4
    tm = max(32, (target_block_bytes // max(row_bytes, 1)) // 32 * 32)
    tm = min(tm, _round_up(num_tokens, 32))          # never taller than padded tokens
    max_two_step = ((num_tokens - 1) // 32) * 32     # largest tm giving >= 2 steps
    if max_two_step >= 32:
        tm = min(tm, max_two_step)
    return tm


def dequant_silu_and_mul_quant(x, dequant_scale: float = 1.0, quant_scale: float = 1.0,
                               use_per_token_quant: bool = True, tm: int | None = None):
    """Pallas port of DequantSiluAndMulQuant.forward.

    Args:
      x: int32 array of shape (num_tokens, 2*d).
    Returns:
      (out_int8 (num_tokens, d), scale_f32 (num_tokens,)) if use_per_token_quant
      else (out_int8 (num_tokens, d),).
    """
    num_tokens, two_d = x.shape
    d = two_d // 2
    assert two_d == 2 * d
    # TODO(synk): d not a multiple of 128 would need masked lane handling inside the
    # block; the free in-kernel gate/up slice split requires d % 128 == 0 (true for
    # real MLP intermediate sizes).
    assert d % 128 == 0, "d must be a multiple of 128 for the lane-aligned gate/up split"

    target_block_bytes, vmem_clamp = _vmem_budget()
    if tm is None:
        tm = _choose_tm(num_tokens, d, target_block_bytes)
    assert tm >= 1

    grid = (pl.cdiv(num_tokens, tm),)
    # Single fully contiguous (tm, 2d) int32 DMA per step; gate/up split happens
    # in-kernel on lane-tile boundaries.
    in_specs = [pl.BlockSpec((tm, 2 * d), lambda i: (i, 0))]

    # VMEM accounting: double-buffered input+output blocks + one f32 block temp for
    # `t` (per-token branch only; the static branch fuses fully elementwise), plus
    # headroom. Clamped to the generation-aware scoped limit.
    in_block = tm * 2 * d * 4
    out_block = tm * d + tm * 4
    temps = (2 if use_per_token_quant else 1) * tm * d * 4
    vmem_bytes = 2 * (in_block + out_block) + temps + (2 << 20)
    vmem_bytes = int(min(max(vmem_bytes, 16 << 20), vmem_clamp))
    compiler_params = pltpu.CompilerParams(
        # Token axis is fully parallel -> megacore-sharded on v7x (2 TCs) when grid >= 2.
        dimension_semantics=("parallel",),
        vmem_limit_bytes=vmem_bytes,
    )

    # TODO(synk): dequant/quant scales are baked as compile-time constants (they are
    # fixed module buffers); pass via SMEM scalar prefetch if they vary per call.
    if use_per_token_quant:
        kernel = functools.partial(_per_token_kernel, d=d, dequant_scale=float(dequant_scale))
        out, scale = pl.pallas_call(
            kernel,
            out_shape=(
                jax.ShapeDtypeStruct((num_tokens, d), jnp.int8),
                jax.ShapeDtypeStruct((num_tokens, 1), jnp.float32),
            ),
            grid_spec=pltpu.PrefetchScalarGridSpec(
                num_scalar_prefetch=0,
                grid=grid,
                in_specs=in_specs,
                out_specs=[
                    pl.BlockSpec((tm, d), lambda i: (i, 0)),   # lane-dense int8 main output
                    pl.BlockSpec((tm, 1), lambda i: (i, 0)),   # per-token scale column
                ],
            ),
            compiler_params=compiler_params,
        )(x)
        return out, scale.reshape(num_tokens)

    kernel = functools.partial(_static_kernel, d=d, dequant_scale=float(dequant_scale),
                               quant_scale=float(quant_scale))
    out = pl.pallas_call(
        kernel,
        out_shape=jax.ShapeDtypeStruct((num_tokens, d), jnp.int8),
        grid_spec=pltpu.PrefetchScalarGridSpec(
            num_scalar_prefetch=0,
            grid=grid,
            in_specs=in_specs,
            out_specs=pl.BlockSpec((tm, d), lambda i: (i, 0)),
        ),
        compiler_params=compiler_params,
    )(x)
    return (out,)


def _reference_per_token(x, dequant_scale):
    xf = x.astype(jnp.float32) * dequant_scale
    d = x.shape[-1] // 2
    gate, up = xf[:, :d], xf[:, d:]
    tmp = gate * jax.nn.sigmoid(gate) * up
    amax = jnp.max(jnp.abs(tmp), axis=-1, keepdims=True)
    scale = amax / 127.0
    q = jnp.clip(jnp.rint(tmp / jnp.where(scale > 0, scale, 1.0)), -127, 127).astype(jnp.int8)
    return q, scale.reshape(-1)


def _reference_static(x, dequant_scale, quant_scale):
    xf = x.astype(jnp.float32) * dequant_scale
    d = x.shape[-1] // 2
    gate, up = xf[:, :d], xf[:, d:]
    tmp = gate * jax.nn.sigmoid(gate) * up
    return jnp.clip(jnp.rint(tmp / quant_scale), -127, 127).astype(jnp.int8)


if __name__ == "__main__":
    # Deterministic synthetic setup (module buffers).
    dequant_scale = 0.01
    quant_scale = 0.25

    num_tokens, d = 256, 256
    key = jax.random.PRNGKey(0)
    # Simulated int8-GEMM int32 accumulators.
    x = jax.random.randint(key, (num_tokens, 2 * d), -(2 ** 12), 2 ** 12, dtype=jnp.int32)

    # --- Per-token-quant branch; tm=64 -> 4 grid steps (pipelining + v7x megacore). ---
    out, scale = dequant_silu_and_mul_quant(x, dequant_scale, tm=64)
    out = jax.block_until_ready(out)
    scale = jax.block_until_ready(scale)

    ref_out, ref_scale = _reference_per_token(x, dequant_scale)
    assert out.shape == (num_tokens, d) and out.dtype == jnp.int8
    assert scale.shape == (num_tokens,) and scale.dtype == jnp.float32
    assert jnp.allclose(scale, ref_scale, rtol=1e-5, atol=1e-7)
    # Allow off-by-one from rounding-order differences at exact .5 boundaries.
    assert int(jnp.max(jnp.abs(out.astype(jnp.int32) - ref_out.astype(jnp.int32)))) <= 1

    # --- Per-token branch with the default (hardware-aware) tile choice. ---
    out_d, scale_d = dequant_silu_and_mul_quant(x, dequant_scale)
    out_d = jax.block_until_ready(out_d)
    scale_d = jax.block_until_ready(scale_d)
    assert jnp.allclose(scale_d, ref_scale, rtol=1e-5, atol=1e-7)
    assert int(jnp.max(jnp.abs(out_d.astype(jnp.int32) - ref_out.astype(jnp.int32)))) <= 1

    # --- Ragged token count (cdiv grid, padded/masked trailing block). ---
    num_tokens_r = 200
    x_r = jax.random.randint(jax.random.PRNGKey(1), (num_tokens_r, 2 * d),
                             -(2 ** 12), 2 ** 12, dtype=jnp.int32)
    out_r, scale_r = dequant_silu_and_mul_quant(x_r, dequant_scale, tm=64)
    out_r = jax.block_until_ready(out_r)
    scale_r = jax.block_until_ready(scale_r)
    ref_out_r, ref_scale_r = _reference_per_token(x_r, dequant_scale)
    assert out_r.shape == (num_tokens_r, d) and scale_r.shape == (num_tokens_r,)
    assert jnp.allclose(scale_r, ref_scale_r, rtol=1e-5, atol=1e-7)
    assert int(jnp.max(jnp.abs(out_r.astype(jnp.int32) - ref_out_r.astype(jnp.int32)))) <= 1

    # --- Static-scale branch (use_per_token_quant=False). ---
    (out_s,) = dequant_silu_and_mul_quant(x, dequant_scale, quant_scale,
                                          use_per_token_quant=False, tm=64)
    out_s = jax.block_until_ready(out_s)
    ref_s = _reference_static(x, dequant_scale, quant_scale)
    assert out_s.shape == (num_tokens, d) and out_s.dtype == jnp.int8
    assert int(jnp.max(jnp.abs(out_s.astype(jnp.int32) - ref_s.astype(jnp.int32)))) <= 1

    print("KERNEL_OK")
</pallas_src>

<mosaic_0001>
module attributes {stable_mosaic.version = 11 : i64} {
  func.func @_per_token_kernel(%arg0: i32, %arg1: memref<64x512xi32, #tpu.memory_space<vmem>>, %arg2: memref<64x256xi8, #tpu.memory_space<vmem>>, %arg3: memref<64x1xf32, #tpu.memory_space<vmem>>) attributes {dimension_semantics = [#tpu.dimension_semantics<parallel>], iteration_bounds = array<i64: 4>, scalar_prefetch = 0 : i64, scratch_operands = 0 : i64, tpu.core_type = #tpu.core_type<tc>, window_params = [{transform_indices = @transform_0, window_bounds = array<i64: 64, 512>}, {transform_indices = @transform_1, window_bounds = array<i64: 64, 256>}, {transform_indices = @transform_2, window_bounds = array<i64: 64, 1>}]} {
    %c0 = arith.constant 0 : index
    %c0_0 = arith.constant 0 : index
    %0 = vector.load %arg1[%c0, %c0_0] : memref<64x512xi32, #tpu.memory_space<vmem>>, vector<64x256xi32>
    %1 = arith.sitofp %0 : vector<64x256xi32> to vector<64x256xf32>
    %cst = arith.constant 0.00999999977 : f32
    %2 = vector.broadcast %cst : f32 to vector<64x256xf32>
    %3 = arith.mulf %1, %2 : vector<64x256xf32>
    %c0_1 = arith.constant 0 : index
    %c256 = arith.constant 256 : index
    %4 = vector.load %arg1[%c0_1, %c256] : memref<64x512xi32, #tpu.memory_space<vmem>>, vector<64x256xi32>
    %5 = arith.sitofp %4 : vector<64x256xi32> to vector<64x256xf32>
    %6 = arith.negf %3 : vector<64x256xf32>
    %7 = math.exp %6 : vector<64x256xf32>
    %cst_2 = arith.constant 1.000000e+00 : f32
    %8 = vector.broadcast %cst_2 : f32 to vector<64x256xf32>
    %9 = arith.addf %8, %7 : vector<64x256xf32>
    %10 = arith.divf %8, %9 : vector<64x256xf32>
    %11 = arith.mulf %3, %10 : vector<64x256xf32>
    %12 = arith.mulf %11, %5 : vector<64x256xf32>
    %13 = math.absf %12 : vector<64x256xf32>
    %cst_3 = arith.constant dense<0xFF800000> : vector<64xf32>
    %14 = vector.multi_reduction <maximumf>, %13, %cst_3 [1] : vector<64x256xf32> to vector<64xf32>
    %15 = vector.shape_cast %14 : vector<64xf32> to vector<64x1xf32>
    %cst_4 = arith.constant 7.87401586E-5 : f32
    %16 = vector.broadcast %cst_4 : f32 to vector<64x1xf32>
    %17 = arith.mulf %15, %16 : vector<64x1xf32>
    %c0_5 = arith.constant 0 : index
    %c0_6 = arith.constant 0 : index
    %18 = vector.load %arg3[%c0_5, %c0_6] : memref<64x1xf32, #tpu.memory_space<vmem>>, vector<64x1xf32>
    tpu.vector_store %arg3[%c0_5, %c0_6], %17 {strides = array<i32>} : memref<64x1xf32, #tpu.memory_space<vmem>>, vector<64x1xf32>,
    %cst_7 = arith.constant 1.000000e-30 : f32
    %19 = vector.broadcast %cst_7 : f32 to vector<64x1xf32>
    %20 = arith.maximumf %15, %19 : vector<64x1xf32>
    %21 = tpu.reciprocal %20 {approx = true} : vector<64x1xf32> -> vector<64x1xf32>
    %22 = arith.mulf %20, %21 : vector<64x1xf32>
    %cst_8 = arith.constant 2.000000e+00 : f32
    %23 = vector.broadcast %cst_8 : f32 to vector<64x1xf32>
    %24 = arith.subf %23, %22 : vector<64x1xf32>
    %25 = arith.mulf %21, %24 : vector<64x1xf32>
    %cst_9 = arith.constant 1.270000e+02 : f32
    %26 = vector.broadcast %cst_9 : f32 to vector<64x1xf32>
    %27 = arith.mulf %26, %25 : vector<64x1xf32>
    %28 = vector.broadcast %27 : vector<64x1xf32> to vector<64x256xf32>
    %29 = arith.mulf %12, %28 : vector<64x256xf32>
    %30 = math.roundeven %29 : vector<64x256xf32>
    %cst_10 = arith.constant -1.270000e+02 : f32
    %cst_11 = arith.constant 1.270000e+02 : f32
    %31 = vector.broadcast %cst_10 : f32 to vector<64x256xf32>
    %32 = arith.maximumf %31, %30 : vector<64x256xf32>
    %33 = vector.broadcast %cst_11 : f32 to vector<64x256xf32>
    %34 = arith.minimumf %33, %32 : vector<64x256xf32>
    %35 = arith.fptosi %34 : vector<64x256xf32> to vector<64x256xi8>
    %c0_12 = arith.constant 0 : index
    %c0_13 = arith.constant 0 : index
    %36 = vector.load %arg2[%c0_12, %c0_13] : memref<64x256xi8, #tpu.memory_space<vmem>>, vector<64x256xi8>
    tpu.vector_store %arg2[%c0_12, %c0_13], %35 {strides = array<i32>} : memref<64x256xi8, #tpu.memory_space<vmem>>, vector<64x256xi8>,
    return
  }
  func.func @transform_0(%arg0: i32) -> (i32, i32) {
    %c0_i32 = arith.constant 0 : i32
    %c0_i32_0 = arith.constant 0 : i32
    return %arg0, %c0_i32 : i32, i32
  }
  func.func @transform_1(%arg0: i32) -> (i32, i32) {
    %c0_i32 = arith.constant 0 : i32
    %c0_i32_0 = arith.constant 0 : i32
    return %arg0, %c0_i32 : i32, i32
  }
  func.func @transform_2(%arg0: i32) -> (i32, i32) {
    %c0_i32 = arith.constant 0 : i32
    %c0_i32_0 = arith.constant 0 : i32
    return %arg0, %c0_i32 : i32, i32
  }
}

</mosaic_0001>

<llo_original>
// kernel: tpu_custom_call.1
$region0: #{tpu_custom_call.1}
  #allocation0 [shape = 'u32[]', space=smem, size = 0x4, offset = 0x4, fixed_abs, tag = 'smem constant byte address 0x4 - core index']
  #allocation1 [shape = 'u32[144,128]{1,0:T(1,128)}', space=vmem, size = 0x12000, scoped, tag = 'internal scratch']
  %s0 = inlined_call_operand.hbm [shape: s32[256,512], index: 0, kind: input, shape index: {}]
  %s1 = inlined_call_operand.hbm [shape: s8[256,256], index: 1, kind: output, shape index: {0}]
  %s2 = inlined_call_operand.vmem [shape: f32[256,1], index: 2, kind: output, shape index: {1}]
  %3 = xla_tuple %s1, %s2
  %s4 = sld [smem:[#allocation0]]
  $region49: #{tpu_custom_call.1} parent=0
    _
  %s6 = ssub.s32 1, %s4
  %s7 = scalar_select 0, %s6, %s4
  $region1: #{tpu_custom_call.1} parent=0
    #allocation2 [shape = 'u8[262144]{0}', space=vmem, size = 0x40000, scoped, tag = 'input window, operand 0']
    #allocation3 [shape = 's32[2]{0}', space=sflag, size = 0x8, scoped, tag = 'scoped memory for tpu_custom_call.1']
    #allocation4 [shape = 's32[2]{0}', space=sflag, size = 0x8, scoped, tag = 'scoped memory for tpu_custom_call.1']
    #allocation5 [shape = 'u8[32768]{0}', space=vmem, size = 0x8000, scoped, tag = 'output window, operand 0']
    %8 = vsyncpa [#allocation3], 0
    %s9 = scalar_lea.sflag [#allocation3], 1
    %10 = vsyncpa %s9, 0
    %11 = vsyncpa [#allocation4], 0
    %s12 = scalar_lea.sflag [#allocation4], 1
    %13 = vsyncpa %s12, 0
    loop: start=0, step=1, limit=6
    $region2: #{tpu_custom_call.1} parent=1 // loop_pre_header
      _
    $region3: #{tpu_custom_call.1} parent=1 // loop_header
      %s15 = sphi 0, %s19
      %p16 = scmp.ge.s32.totalorder %s15, 6
      %s25 = sphi 0, %s27
      %s28 = sphi 0, %s25
      %s29 = sphi 0, %s28
      %s45 = sphi 0, %s29
      %s51 = sphi 0, %s53
      %s54 = sphi 0, %s51
      %s55 = sphi 0, %s54
      %s71 = sphi 0, %s55
      %s77 = sphi 0, %s79
      %s80 = sphi 0, %s77
      %s81 = sphi 0, %s80
      %s97 = sphi 0, %s81
    $region4: #{tpu_custom_call.1} parent=1 // loop_header_branch
      %18 = sbr.rel (%p16) target = $region8
    $region5: #{tpu_custom_call.1} parent=1 // loop_body
      %s20 = ssub.s32 %s15, 1
      %s21 = ssub.s32 %s15, 2
      %s22 = sadd.s32 %s15, 1
      %s23 = ssub.s32 %s15, %s22
      %p24 = scmp.eq.s32.totalorder %s23, 0
      %s26 = sadd.s32 %s25, 1
      %s27 = scalar_select %p24, %s25, %s26
      %p30 = pneg %p24
      %p31 = scmp.eq.s32.totalorder %s15, 3
      %p32 = por %p30, %p31
      %p33 = scmp.ne.s32.totalorder %s25, %s28
      %p34 = scmp.eq.s32.totalorder %s15, 0
      %p35 = por %p33, %p34
      %p36 = scmp.ne.s32.totalorder %s25, %s28
      %p37 = scmp.eq.s32.totalorder %s20, 3
      %p38 = por %p36, %p37
      %p39 = scmp.ne.s32.totalorder %s28, %s29
      %p40 = scmp.eq.s32.totalorder %s20, 0
      %p41 = por %p39, %p40
      %p42 = scmp.ne.s32.totalorder %s28, %s29
      %p43 = scmp.eq.s32.totalorder %s21, 3
      %p44 = por %p42, %p43
      %p46 = scmp.ne.s32.totalorder %s29, %s45
      %p47 = scmp.eq.s32.totalorder %s21, 0
      %p48 = por %p46, %p47
      %s49 = ssub.s32 %s15, %s22
      %p50 = scmp.eq.s32.totalorder %s49, 0
      %s52 = sadd.s32 %s51, 1
      %s53 = scalar_select %p50, %s51, %s52
      %p56 = pneg %p50
      %p57 = scmp.eq.s32.totalorder %s15, 3
      %p58 = por %p56, %p57
      %p59 = scmp.ne.s32.totalorder %s51, %s54
      %p60 = scmp.eq.s32.totalorder %s15, 0
      %p61 = por %p59, %p60
      %p62 = scmp.ne.s32.totalorder %s51, %s54
      %p63 = scmp.eq.s32.totalorder %s20, 3
      %p64 = por %p62, %p63
      %p65 = scmp.ne.s32.totalorder %s54, %s55
      %p66 = scmp.eq.s32.totalorder %s20, 0
      %p67 = por %p65, %p66
      %p68 = scmp.ne.s32.totalorder %s54, %s55
      %p69 = scmp.eq.s32.totalorder %s21, 3
      %p70 = por %p68, %p69
      %p72 = scmp.ne.s32.totalorder %s55, %s71
      %p73 = scmp.eq.s32.totalorder %s21, 0
      %p74 = por %p72, %p73
      %s75 = ssub.s32 %s15, %s22
      %p76 = scmp.eq.s32.totalorder %s75, 0
      %s78 = sadd.s32 %s77, 1
      %s79 = scalar_select %p76, %s77, %s78
      %p82 = pneg %p76
      %p83 = scmp.eq.s32.totalorder %s15, 3
      %p84 = por %p82, %p83
      %p85 = scmp.ne.s32.totalorder %s77, %s80
      %p86 = scmp.eq.s32.totalorder %s15, 0
      %p87 = por %p85, %p86
      %p88 = scmp.ne.s32.totalorder %s77, %s80
      %p89 = scmp.eq.s32.totalorder %s20, 3
      %p90 = por %p88, %p89
      %p91 = scmp.ne.s32.totalorder %s80, %s81
      %p92 = scmp.eq.s32.totalorder %s20, 0
      %p93 = por %p91, %p92
      %p94 = scmp.ne.s32.totalorder %s80, %s81
      %p95 = scmp.eq.s32.totalorder %s21, 3
      %p96 = por %p94, %p95
      %p98 = scmp.ne.s32.totalorder %s81, %s97
      %p99 = scmp.eq.s32.totalorder %s21, 0
      %p100 = por %p98, %p99
      %p101 = scmp.le.s32.totalorder 1, %s15
      %p102 = scmp.lt.s32.totalorder %s15, 5
      %p103 = pnand %p101, %p102
      %p104 = pneg %p103
      // Predicated region
      $region9: #{tpu_custom_call.1} parent=5 // pred_check
        _
      $region10: #{tpu_custom_call.1} parent=5 // pred_check_branch
        %106 = sbr.rel (%p103) target = $region12
      $region11: #{tpu_custom_call.1} parent=5 // pred_region
        %s107 = ssub.s32 %s15, 1
      $region12: #{tpu_custom_call.1} parent=5 // pred_fallthru
        _
      %p108 = scmp.lt.s32.totalorder %s15, 4
      // Predicated region
      $region13: #{tpu_custom_call.1} parent=5 // pred_check
        %p109 = pneg %p108
      $region14: #{tpu_custom_call.1} parent=5 // pred_check_branch
        %111 = sbr.rel (%p109) target = $region16
      $region15: #{tpu_custom_call.1} parent=5 // pred_region
        // Predicated region
        $region17: #{tpu_custom_call.1} parent=15 // pred_check
          %p112 = pneg %p35
        $region18: #{tpu_custom_call.1} parent=15 // pred_check_branch
          %114 = sbr.rel (%p112) target = $region20
        $region19: #{tpu_custom_call.1} parent=15 // pred_region
          %s115 = sand.u32 %s25, 1
          %s116 = scalar_lea.sflag [#allocation3], %s115
          %s117 = sand.u32 %s25, 1
          %s118 = smul.addr %s117, 256
          %s119 = scalar_lea.vmem [#allocation2], %s118
          %s120 = smul.u32 8, %s15
          %s122 = ssub.s32 4096, 4096
          %123 = vsyncadd %s116, %s122
          %s124 = smul.addr %s120, 4
          %s125 = smul.addr %s124, 128
          %s126 = scalar_lea.hbm %s0, %s125
          %s127 = sshll.u32 %s119, 4
          %s128 = int_to_ptr.vmem [resolvable:$true] %s127
          %133 = dma.hbm_to_vmem [thread:$0]  %s126, 4096, %s128, %s116, 512, 512, 32
        $region20: #{tpu_custom_call.1} parent=15 // pred_fallthru
          _
      $region16: #{tpu_custom_call.1} parent=5 // pred_fallthru
        _
      %p134 = scmp.le.s32.totalorder 1, %s15
      %p135 = scmp.lt.s32.totalorder %s15, 5
      %p136 = pnand %p134, %p135
      %p137 = pneg %p136
      // Predicated region
      $region21: #{tpu_custom_call.1} parent=5 // pred_check
        _
      $region22: #{tpu_custom_call.1} parent=5 // pred_check_branch
        %139 = sbr.rel (%p136) target = $region24
      $region23: #{tpu_custom_call.1} parent=5 // pred_region
        %s140 = ssub.s32 %s15, 1
        %s141 = sand.u32 %s28, 1
        %s142 = scalar_lea.sflag [#allocation3], %s141
        %s143 = sand.u32 %s28, 1
        %s144 = smul.addr %s143, 256
        %s145 = scalar_lea.vmem [#allocation2], %s144
        // Predicated region
        $region25: #{tpu_custom_call.1} parent=23 // pred_check
          %p146 = pneg %p41
        $region26: #{tpu_custom_call.1} parent=23 // pred_check_branch
          %148 = sbr.rel (%p146) target = $region28
        $region27: #{tpu_custom_call.1} parent=23 // pred_region
          %149 = dma.done %s142, 4096
        $region28: #{tpu_custom_call.1} parent=23 // pred_fallthru
          _
        %s150 = sand.u32 %s28, 1
        %s151 = scalar_lea.sflag [#allocation3], %s150
        %s152 = sand.u32 %s28, 1
        %s153 = smul.addr %s152, 256
        %s154 = scalar_lea.vmem [#allocation2], %s153
        %p155 = pneg %p41
        %p156 = pneg %p38
        %p157 = pneg %p67
        %p158 = pneg %p64
        %s159 = sand.u32 %s54, 1
        %s160 = scalar_lea.sflag [#allocation4], %s159
        %s161 = sand.u32 %s54, 1
        %s162 = smul.addr %s161, 32
        %s163 = scalar_lea.vmem [#allocation5], %s162
        %p164 = pneg %p93
        %p165 = pneg %p90
        %s166 = smul.u32 8, %s20
        %p167 = scmp.lt.s32.totalorder %s166, 31
        %s168 = scalar_select %p167, %s166, 31
        %s169 = smul.addr %s168, 8
        %s170 = scalar_lea.vmem %s2, %s169
        %s171 = smul.u32 8, %s20
        %s172 = smul.u32 2, %s20
        %s173 = smul.u32 8, %s20
        %p174 = scmp.lt.s32.totalorder %s173, 31
        %s175 = scalar_select %p174, %s173, 31
        %s176 = smul.addr %s175, 8
        %s177 = scalar_lea.vmem %s2, %s176
        %s178 = smul.u32 8, %s20
        %v179 = vld [vmem:[%s145] sm:$0xff]
        %v180 = vld [vmem:[%s145 + $0x8] sm:$0xff]
        %v181 = vld [vmem:[%s145 + $0x20] sm:$0xff]
        %v182 = vld [vmem:[%s145 + $0x28] sm:$0xff]
        %v183 = vld [vmem:[%s145 + $0x40] sm:$0xff]
        %v184 = vld [vmem:[%s145 + $0x48] sm:$0xff]
        %v185 = vld [vmem:[%s145 + $0x60] sm:$0xff]
        %v186 = vld [vmem:[%s145 + $0x68] sm:$0xff]
        %v187 = vld [vmem:[%s145 + $0x80] sm:$0xff]
        %v188 = vld [vmem:[%s145 + $0x88] sm:$0xff]
        %v189 = vld [vmem:[%s145 + $0xa0] sm:$0xff]
        %v190 = vld [vmem:[%s145 + $0xa8] sm:$0xff]
        %v191 = vld [vmem:[%s145 + $0xc0] sm:$0xff]
        %v192 = vld [vmem:[%s145 + $0xc8] sm:$0xff]
        %v193 = vld [vmem:[%s145 + $0xe0] sm:$0xff]
        %v194 = vld [vmem:[%s145 + $0xe8] sm:$0xff]
        %v195 = vcvt.s32.f32 %v179
        %v196 = vcvt.s32.f32 %v180
        %v197 = vcvt.s32.f32 %v181
        %v198 = vcvt.s32.f32 %v182
        %v199 = vcvt.s32.f32 %v183
        %v200 = vcvt.s32.f32 %v184
        %v201 = vcvt.s32.f32 %v185
        %v202 = vcvt.s32.f32 %v186
        %v203 = vcvt.s32.f32 %v187
        %v204 = vcvt.s32.f32 %v188
        %v205 = vcvt.s32.f32 %v189
        %v206 = vcvt.s32.f32 %v190
        %v207 = vcvt.s32.f32 %v191
        %v208 = vcvt.s32.f32 %v192
        %v209 = vcvt.s32.f32 %v193
        %v210 = vcvt.s32.f32 %v194
        %v211 = vmul.f32 %v195, 0.01
        %v212 = vmul.f32 %v196, 0.01
        %v213 = vmul.f32 %v197, 0.01
        %v214 = vmul.f32 %v198, 0.01
        %v215 = vmul.f32 %v199, 0.01
        %v216 = vmul.f32 %v200, 0.01
        %v217 = vmul.f32 %v201, 0.01
        %v218 = vmul.f32 %v202, 0.01
        %v219 = vmul.f32 %v203, 0.01
        %v220 = vmul.f32 %v204, 0.01
        %v221 = vmul.f32 %v205, 0.01
        %v222 = vmul.f32 %v206, 0.01
        %v223 = vmul.f32 %v207, 0.01
        %v224 = vmul.f32 %v208, 0.01
        %v225 = vmul.f32 %v209, 0.01
        %v226 = vmul.f32 %v210, 0.01
        %v227 = vld [vmem:[%s145 + $0x10] sm:$0xff]
        %v228 = vld [vmem:[%s145 + $0x18] sm:$0xff]
        %v229 = vld [vmem:[%s145 + $0x30] sm:$0xff]
        %v230 = vld [vmem:[%s145 + $0x38] sm:$0xff]
        %v231 = vld [vmem:[%s145 + $0x50] sm:$0xff]
        %v232 = vld [vmem:[%s145 + $0x58] sm:$0xff]
        %v233 = vld [vmem:[%s145 + $0x70] sm:$0xff]
        %v234 = vld [vmem:[%s145 + $0x78] sm:$0xff]
        %v235 = vld [vmem:[%s145 + $0x90] sm:$0xff]
        %v236 = vld [vmem:[%s145 + $0x98] sm:$0xff]
        %v237 = vld [vmem:[%s145 + $0xb0] sm:$0xff]
        %v238 = vld [vmem:[%s145 + $0xb8] sm:$0xff]
        %v239 = vld [vmem:[%s145 + $0xd0] sm:$0xff]
        %v240 = vld [vmem:[%s145 + $0xd8] sm:$0xff]
        %v241 = vld [vmem:[%s145 + $0xf0] sm:$0xff]
        %v242 = vld [vmem:[%s145 + $0xf8] sm:$0xff]
        %v243 = vcvt.s32.f32 %v227
        %v244 = vcvt.s32.f32 %v228
        %v245 = vcvt.s32.f32 %v229
        %v246 = vcvt.s32.f32 %v230
        %v247 = vcvt.s32.f32 %v231
        %v248 = vcvt.s32.f32 %v232
        %v249 = vcvt.s32.f32 %v233
        %v250 = vcvt.s32.f32 %v234
        %v251 = vcvt.s32.f32 %v235
        %v252 = vcvt.s32.f32 %v236
        %v253 = vcvt.s32.f32 %v237
        %v254 = vcvt.s32.f32 %v238
        %v255 = vcvt.s32.f32 %v239
        %v256 = vcvt.s32.f32 %v240
        %v257 = vcvt.s32.f32 %v241
        %v258 = vcvt.s32.f32 %v242
        %v259 = vxor.u32 %v211, 2147483648
        %v260 = vxor.u32 %v212, 2147483648
        %v261 = vxor.u32 %v213, 2147483648
        %v262 = vxor.u32 %v214, 2147483648
        %v263 = vxor.u32 %v215, 2147483648
        %v264 = vxor.u32 %v216, 2147483648
        %v265 = vxor.u32 %v217, 2147483648
        %v266 = vxor.u32 %v218, 2147483648
        %v267 = vxor.u32 %v219, 2147483648
        %v268 = vxor.u32 %v220, 2147483648
        %v269 = vxor.u32 %v221, 2147483648
        %v270 = vxor.u32 %v222, 2147483648
        %v271 = vxor.u32 %v223, 2147483648
        %v272 = vxor.u32 %v224, 2147483648
        %v273 = vxor.u32 %v225, 2147483648
        %v274 = vxor.u32 %v226, 2147483648
        %v275 = vmul.f32 %v259, 1.442695
        %v276 = vpow.pop %v275
        %v277 = vmul.f32 %v260, 1.442695
        %v278 = vpow.pop %v277
        %v279 = vmul.f32 %v261, 1.442695
        %v280 = vpow.pop %v279
        %v281 = vmul.f32 %v262, 1.442695
        %v282 = vpow.pop %v281
        %v283 = vmul.f32 %v263, 1.442695
        %v284 = vpow.pop %v283
        %v285 = vmul.f32 %v264, 1.442695
        %v286 = vpow.pop %v285
        %v287 = vmul.f32 %v265, 1.442695
        %v288 = vpow.pop %v287
        %v289 = vmul.f32 %v266, 1.442695
        %v290 = vpow.pop %v289
        %v291 = vmul.f32 %v267, 1.442695
        %v292 = vpow.pop %v291
        %v293 = vmul.f32 %v268, 1.442695
        %v294 = vpow.pop %v293
        %v295 = vmul.f32 %v269, 1.442695
        %v296 = vpow.pop %v295
        %v297 = vmul.f32 %v270, 1.442695
        %v298 = vpow.pop %v297
        %v299 = vmul.f32 %v271, 1.442695
        %v300 = vpow.pop %v299
        %v301 = vmul.f32 %v272, 1.442695
        %v302 = vpow.pop %v301
        %v303 = vmul.f32 %v273, 1.442695
        %v304 = vpow.pop %v303
        %v305 = vmul.f32 %v274, 1.442695
        %v306 = vpow.pop %v305
        %v307 = vadd.f32 %v276, 1.0
        %v308 = vadd.f32 %v278, 1.0
        %v309 = vadd.f32 %v280, 1.0
        %v310 = vadd.f32 %v282, 1.0
        %v311 = vadd.f32 %v284, 1.0
        %v312 = vadd.f32 %v286, 1.0
        %v313 = vadd.f32 %v288, 1.0
        %v314 = vadd.f32 %v290, 1.0
        %v315 = vadd.f32 %v292, 1.0
        %v316 = vadd.f32 %v294, 1.0
        %v317 = vadd.f32 %v296, 1.0
        %v318 = vadd.f32 %v298, 1.0
        %v319 = vadd.f32 %v300, 1.0
        %v320 = vadd.f32 %v302, 1.0
        %v321 = vadd.f32 %v304, 1.0
        %v322 = vadd.f32 %v306, 1.0
        %v323 = vrcp.pop %v307
        %v324 = vmul.f32 1.0, %v323
        %v325 = vrcp.pop %v308
        %v326 = vmul.f32 1.0, %v325
        %v327 = vrcp.pop %v309
        %v328 = vmul.f32 1.0, %v327
        %v329 = vrcp.pop %v310
        %v330 = vmul.f32 1.0, %v329
        %v331 = vrcp.pop %v311
        %v332 = vmul.f32 1.0, %v331
        %v333 = vrcp.pop %v312
        %v334 = vmul.f32 1.0, %v333
        %v335 = vrcp.pop %v313
        %v336 = vmul.f32 1.0, %v335
        %v337 = vrcp.pop %v314
        %v338 = vmul.f32 1.0, %v337
        %v339 = vrcp.pop %v315
        %v340 = vmul.f32 1.0, %v339
        %v341 = vrcp.pop %v316
        %v342 = vmul.f32 1.0, %v341
        %v343 = vrcp.pop %v317
        %v344 = vmul.f32 1.0, %v343
        %v345 = vrcp.pop %v318
        %v346 = vmul.f32 1.0, %v345
        %v347 = vrcp.pop %v319
        %v348 = vmul.f32 1.0, %v347
        %v349 = vrcp.pop %v320
        %v350 = vmul.f32 1.0, %v349
        %v351 = vrcp.pop %v321
        %v352 = vmul.f32 1.0, %v351
        %v353 = vrcp.pop %v322
        %v354 = vmul.f32 1.0, %v353
        %v355 = vmul.f32 %v211, %v324
        %v356 = vmul.f32 %v212, %v326
        %v357 = vmul.f32 %v213, %v328
        %v358 = vmul.f32 %v214, %v330
        %v359 = vmul.f32 %v215, %v332
        %v360 = vmul.f32 %v216, %v334
        %v361 = vmul.f32 %v217, %v336
        %v362 = vmul.f32 %v218, %v338
        %v363 = vmul.f32 %v219, %v340
        %v364 = vmul.f32 %v220, %v342
        %v365 = vmul.f32 %v221, %v344
        %v366 = vmul.f32 %v222, %v346
        %v367 = vmul.f32 %v223, %v348
        %v368 = vmul.f32 %v224, %v350
        %v369 = vmul.f32 %v225, %v352
        %v370 = vmul.f32 %v226, %v354
        %v371 = vmul.f32 %v355, %v243
        %v372 = vmul.f32 %v356, %v244
        %v373 = vmul.f32 %v357, %v245
        %v374 = vmul.f32 %v358, %v246
        %v375 = vmul.f32 %v359, %v247
        %v376 = vmul.f32 %v360, %v248
        %v377 = vmul.f32 %v361, %v249
        %v378 = vmul.f32 %v362, %v250
        %v379 = vmul.f32 %v363, %v251
        %v380 = vmul.f32 %v364, %v252
        %v381 = vmul.f32 %v365, %v253
        %v382 = vmul.f32 %v366, %v254
        %v383 = vmul.f32 %v367, %v255
        %v384 = vmul.f32 %v368, %v256
        %v385 = vmul.f32 %v369, %v257
        %v386 = vmul.f32 %v370, %v258
        %v387 = vand.u32 2147483647, %v371
        %v388 = vand.u32 2147483647, %v372
        %v389 = vand.u32 2147483647, %v373
        %v390 = vand.u32 2147483647, %v374
        %v391 = vand.u32 2147483647, %v375
        %v392 = vand.u32 2147483647, %v376
        %v393 = vand.u32 2147483647, %v377
        %v394 = vand.u32 2147483647, %v378
        %v395 = vand.u32 2147483647, %v379
        %v396 = vand.u32 2147483647, %v380
        %v397 = vand.u32 2147483647, %v381
        %v398 = vand.u32 2147483647, %v382
        %v399 = vand.u32 2147483647, %v383
        %v400 = vand.u32 2147483647, %v384
        %v401 = vand.u32 2147483647, %v385
        %v402 = vand.u32 2147483647, %v386
        %v403 = vmax.f32 %v387, %v388
        %404 = vmax.xlane.f32.xlu0 %v403
        %v405 = vpop.xlane.xlu0 %404
        %v406 = vmax.f32 %v389, %v390
        %407 = vmax.xlane.f32.xlu0 %v406
        %v408 = vpop.xlane.xlu0 %407
        %v409 = vmax.f32 %v391, %v392
        %410 = vmax.xlane.f32.xlu0 %v409
        %v411 = vpop.xlane.xlu0 %410
        %v412 = vmax.f32 %v393, %v394
        %413 = vmax.xlane.f32.xlu0 %v412
        %v414 = vpop.xlane.xlu0 %413
        %v415 = vmax.f32 %v395, %v396
        %416 = vmax.xlane.f32.xlu0 %v415
        %v417 = vpop.xlane.xlu0 %416
        %v418 = vmax.f32 %v397, %v398
        %419 = vmax.xlane.f32.xlu0 %v418
        %v420 = vpop.xlane.xlu0 %419
        %v421 = vmax.f32 %v399, %v400
        %422 = vmax.xlane.f32.xlu0 %v421
        %v423 = vpop.xlane.xlu0 %422
        %v424 = vmax.f32 %v401, %v402
        %425 = vmax.xlane.f32.xlu0 %v424
        %v426 = vpop.xlane.xlu0 %425
        %v427 = vmul.f32 %v405, 7.874016e-05
        %v428 = vmul.f32 %v408, 7.874016e-05
        %v429 = vmul.f32 %v411, 7.874016e-05
        %v430 = vmul.f32 %v414, 7.874016e-05
        %v431 = vmul.f32 %v417, 7.874016e-05
        %v432 = vmul.f32 %v420, 7.874016e-05
        %v433 = vmul.f32 %v423, 7.874016e-05
        %v434 = vmul.f32 %v426, 7.874016e-05
        %vm435 = vcmask 7168
        %436 = vst.msk [vmem:[%s177] sm:$0xff] %vm435, %v427
        %437 = vst.msk [vmem:[%s177 + $0x8] sm:$0xff] %vm435, %v428
        %438 = vst.msk [vmem:[%s177 + $0x10] sm:$0xff] %vm435, %v429
        %439 = vst.msk [vmem:[%s177 + $0x18] sm:$0xff] %vm435, %v430
        %440 = vst.msk [vmem:[%s177 + $0x20] sm:$0xff] %vm435, %v431
        %441 = vst.msk [vmem:[%s177 + $0x28] sm:$0xff] %vm435, %v432
        %442 = vst.msk [vmem:[%s177 + $0x30] sm:$0xff] %vm435, %v433
        %443 = vst.msk [vmem:[%s177 + $0x38] sm:$0xff] %vm435, %v434
        %v444 = vmax.f32 %v405, 1e-30
        %v445 = vmax.f32 %v408, 1e-30
        %v446 = vmax.f32 %v411, 1e-30
        %v447 = vmax.f32 %v414, 1e-30
        %v448 = vmax.f32 %v417, 1e-30
        %v449 = vmax.f32 %v420, 1e-30
        %v450 = vmax.f32 %v423, 1e-30
        %v451 = vmax.f32 %v426, 1e-30
        %v452 = vrcp.pop %v444
        %v453 = vrcp.pop %v445
        %v454 = vrcp.pop %v446
        %v455 = vrcp.pop %v447
        %v456 = vrcp.pop %v448
        %v457 = vrcp.pop %v449
        %v458 = vrcp.pop %v450
        %v459 = vrcp.pop %v451
        %v460 = vmul.f32 %v444, %v452
        %v461 = vmul.f32 %v445, %v453
        %v462 = vmul.f32 %v446, %v454
        %v463 = vmul.f32 %v447, %v455
        %v464 = vmul.f32 %v448, %v456
        %v465 = vmul.f32 %v449, %v457
        %v466 = vmul.f32 %v450, %v458
        %v467 = vmul.f32 %v451, %v459
        %v468 = vsub.f32 2.0, %v460
        %v469 = vsub.f32 2.0, %v461
        %v470 = vsub.f32 2.0, %v462
        %v471 = vsub.f32 2.0, %v463
        %v472 = vsub.f32 2.0, %v464
        %v473 = vsub.f32 2.0, %v465
        %v474 = vsub.f32 2.0, %v466
        %v475 = vsub.f32 2.0, %v467
        %v476 = vmul.f32 %v452, %v468
        %v477 = vmul.f32 %v453, %v469
        %v478 = vmul.f32 %v454, %v470
        %v479 = vmul.f32 %v455, %v471
        %v480 = vmul.f32 %v456, %v472
        %v481 = vmul.f32 %v457, %v473
        %v482 = vmul.f32 %v458, %v474
        %v483 = vmul.f32 %v459, %v475
        %v484 = vmul.f32 %v476, 127.0
        %v485 = vmul.f32 %v477, 127.0
        %v486 = vmul.f32 %v478, 127.0
        %v487 = vmul.f32 %v479, 127.0
        %v488 = vmul.f32 %v480, 127.0
        %v489 = vmul.f32 %v481, 127.0
        %v490 = vmul.f32 %v482, 127.0
        %v491 = vmul.f32 %v483, 127.0
        %v492 = vmul.f32 %v371, %v484
        %v493 = vmul.f32 %v372, %v484
        %v494 = vmul.f32 %v373, %v485
        %v495 = vmul.f32 %v374, %v485
        %v496 = vmul.f32 %v375, %v486
        %v497 = vmul.f32 %v376, %v486
        %v498 = vmul.f32 %v377, %v487
        %v499 = vmul.f32 %v378, %v487
        %v500 = vmul.f32 %v379, %v488
        %v501 = vmul.f32 %v380, %v488
        %v502 = vmul.f32 %v381, %v489
        %v503 = vmul.f32 %v382, %v489
        %v504 = vmul.f32 %v383, %v490
        %v505 = vmul.f32 %v384, %v490
        %v506 = vmul.f32 %v385, %v491
        %v507 = vmul.f32 %v386, %v491
        %v508 = vround.ne.pseudo %v492
        %v509 = vround.ne.pseudo %v493
        %v510 = vround.ne.pseudo %v494
        %v511 = vround.ne.pseudo %v495
        %v512 = vround.ne.pseudo %v496
        %v513 = vround.ne.pseudo %v497
        %v514 = vround.ne.pseudo %v498
        %v515 = vround.ne.pseudo %v499
        %v516 = vround.ne.pseudo %v500
        %v517 = vround.ne.pseudo %v501
        %v518 = vround.ne.pseudo %v502
        %v519 = vround.ne.pseudo %v503
        %v520 = vround.ne.pseudo %v504
        %v521 = vround.ne.pseudo %v505
        %v522 = vround.ne.pseudo %v506
        %v523 = vround.ne.pseudo %v507
        %v524 = vmax.f32 %v508, -127.0
        %v525 = vmax.f32 %v509, -127.0
        %v526 = vmax.f32 %v510, -127.0
        %v527 = vmax.f32 %v511, -127.0
        %v528 = vmax.f32 %v512, -127.0
        %v529 = vmax.f32 %v513, -127.0
        %v530 = vmax.f32 %v514, -127.0
        %v531 = vmax.f32 %v515, -127.0
        %v532 = vmax.f32 %v516, -127.0
        %v533 = vmax.f32 %v517, -127.0
        %v534 = vmax.f32 %v518, -127.0
        %v535 = vmax.f32 %v519, -127.0
        %v536 = vmax.f32 %v520, -127.0
        %v537 = vmax.f32 %v521, -127.0
        %v538 = vmax.f32 %v522, -127.0
        %v539 = vmax.f32 %v523, -127.0
        %v540 = vmin.f32 %v524, 127.0
        %v541 = vmin.f32 %v525, 127.0
        %v542 = vmin.f32 %v526, 127.0
        %v543 = vmin.f32 %v527, 127.0
        %v544 = vmin.f32 %v528, 127.0
        %v545 = vmin.f32 %v529, 127.0
        %v546 = vmin.f32 %v530, 127.0
        %v547 = vmin.f32 %v531, 127.0
        %v548 = vmin.f32 %v532, 127.0
        %v549 = vmin.f32 %v533, 127.0
        %v550 = vmin.f32 %v534, 127.0
        %v551 = vmin.f32 %v535, 127.0
        %v552 = vmin.f32 %v536, 127.0
        %v553 = vmin.f32 %v537, 127.0
        %v554 = vmin.f32 %v538, 127.0
        %v555 = vmin.f32 %v539, 127.0
        %v556 = vtrunc.f32 %v540
        %v557 = vtrunc.f32 %v541
        %v558 = vtrunc.f32 %v542
        %v559 = vtrunc.f32 %v543
        %v560 = vtrunc.f32 %v544
        %v561 = vtrunc.f32 %v545
        %v562 = vtrunc.f32 %v546
        %v563 = vtrunc.f32 %v547
        %v564 = vtrunc.f32 %v548
        %v565 = vtrunc.f32 %v549
        %v566 = vtrunc.f32 %v550
        %v567 = vtrunc.f32 %v551
        %v568 = vtrunc.f32 %v552
        %v569 = vtrunc.f32 %v553
        %v570 = vtrunc.f32 %v554
        %v571 = vtrunc.f32 %v555
        %v572 = vpack.c.f32.eXmY %v556, %v558, 312
        %v576 = vpack.c.f32.eXmY %v560, %v562, 312
        %v580 = vpack.c.b8 %v576, %v572
        %v582 = vpack.c.f32.eXmY %v557, %v559, 312
        %v586 = vpack.c.f32.eXmY %v561, %v563, 312
        %v590 = vpack.c.b8 %v586, %v582
        %v592 = vpack.c.f32.eXmY %v564, %v566, 312
        %v596 = vpack.c.f32.eXmY %v568, %v570, 312
        %v600 = vpack.c.b8 %v596, %v592
        %v602 = vpack.c.f32.eXmY %v565, %v567, 312
        %v606 = vpack.c.f32.eXmY %v569, %v571, 312
        %v610 = vpack.c.b8 %v606, %v602
        %612 = vst [vmem:[%s163] sm:$0xff] %v580
        %613 = vst [vmem:[%s163 + $0x8] sm:$0xff] %v590
        %614 = vst [vmem:[%s163 + $0x10] sm:$0xff] %v600
        %615 = vst [vmem:[%s163 + $0x18] sm:$0xff] %v610
        %s616 = sand.u32 %s54, 1
        %s617 = scalar_lea.sflag [#allocation4], %s616
        %s618 = sand.u32 %s54, 1
        %s619 = smul.addr %s618, 32
        %s620 = scalar_lea.vmem [#allocation5], %s619
        %s621 = smul.u32 8, %s20
        %p622 = scmp.lt.s32.totalorder %s621, 31
        %s623 = scalar_select %p622, %s621, 31
        %s624 = smul.addr %s623, 8
        %s625 = scalar_lea.vmem %s2, %s624
        // Predicated region
        $region29: #{tpu_custom_call.1} parent=23 // pred_check
          %p626 = pneg %p64
        $region30: #{tpu_custom_call.1} parent=23 // pred_check_branch
          %628 = sbr.rel (%p626) target = $region32
        $region31: #{tpu_custom_call.1} parent=23 // pred_region
          %s629 = smul.u32 2, %s20
          %s631 = ssub.s32 512, 512
          %632 = vsyncadd %s617, %s631
          %s633 = smul.addr %s629, 2
          %s634 = smul.addr %s633, 128
          %s635 = scalar_lea.hbm %s1, %s634
          %s636 = sshll.u32 %s620, 4
          %s637 = int_to_ptr.vmem [resolvable:$true] %s636
          %642 = dma.vmem_to_hbm [thread:$0]  %s637, 512, %s635, %s617, 256, 256, 16
        $region32: #{tpu_custom_call.1} parent=23 // pred_fallthru
          _
        // Predicated region
        $region33: #{tpu_custom_call.1} parent=23 // pred_check
          %p643 = pneg %p90
        $region34: #{tpu_custom_call.1} parent=23 // pred_check_branch
          %645 = sbr.rel (%p643) target = $region36
        $region35: #{tpu_custom_call.1} parent=23 // pred_region
          %s646 = smul.u32 8, %s20
        $region36: #{tpu_custom_call.1} parent=23 // pred_fallthru
          _
      $region24: #{tpu_custom_call.1} parent=5 // pred_fallthru
        _
      %p647 = scmp.le.s32.totalorder 2, %s15
      // Predicated region
      $region37: #{tpu_custom_call.1} parent=5 // pred_check
        %p648 = pneg %p647
      $region38: #{tpu_custom_call.1} parent=5 // pred_check_branch
        %650 = sbr.rel (%p648) target = $region40
      $region39: #{tpu_custom_call.1} parent=5 // pred_region
        %s651 = ssub.s32 %s15, 2
        // Predicated region
        $region41: #{tpu_custom_call.1} parent=39 // pred_check
          %p652 = pneg %p70
        $region42: #{tpu_custom_call.1} parent=39 // pred_check_branch
          %654 = sbr.rel (%p652) target = $region44
        $region43: #{tpu_custom_call.1} parent=39 // pred_region
          %s655 = sand.u32 %s55, 1
          %s656 = scalar_lea.sflag [#allocation4], %s655
          %s657 = sand.u32 %s55, 1
          %s658 = smul.addr %s657, 32
          %s659 = scalar_lea.vmem [#allocation5], %s658
          %660 = dma.done %s656, 512
        $region44: #{tpu_custom_call.1} parent=39 // pred_fallthru
          _
        // Predicated region
        $region45: #{tpu_custom_call.1} parent=39 // pred_check
          %p661 = pneg %p96
        $region46: #{tpu_custom_call.1} parent=39 // pred_check_branch
          %663 = sbr.rel (%p661) target = $region48
        $region47: #{tpu_custom_call.1} parent=39 // pred_region
          %s664 = smul.u32 8, %s21
          %p665 = scmp.lt.s32.totalorder %s664, 31
          %s666 = scalar_select %p665, %s664, 31
          %s667 = smul.addr %s666, 8
          %s668 = scalar_lea.vmem %s2, %s667
        $region48: #{tpu_custom_call.1} parent=39 // pred_fallthru
          _
      $region40: #{tpu_custom_call.1} parent=5 // pred_fallthru
        _
    $region6: #{tpu_custom_call.1} parent=1 // loop_footer
      %s19 = sadd.s32 1, %s15
    $region7: #{tpu_custom_call.1} parent=1 // loop_footer_branch
      %14 = sbr.rel target = $region3
    $region8: #{tpu_custom_call.1} parent=1 // loop_exit
      _
    %669 = vsyncpa [#allocation3], 1
    %s670 = scalar_lea.sflag [#allocation3], 1
    %671 = vsyncpa %s670, 1
    %672 = vsyncpa [#allocation4], 1
    %s673 = scalar_lea.sflag [#allocation4], 1
    %674 = vsyncpa %s673, 1

</llo_original>
